<compile_context>
chip_gen: v7x
topology: tpu7x:2x2x1
jax: 0.10.0
libtpu: 0.0.40
codegen_flags: <defaults>
</compile_context>

<pallas_src>
import functools

import jax
import jax.numpy as jnp
from jax import lax
from jax.experimental import pallas as pl
from jax.experimental.pallas import tpu as pltpu

_LANE = 128
_SUBLANE = 8
_PACK = _LANE * _SUBLANE          # 1024 elements per (8, 128) f32 vreg tile
_NEG_FILL = -1e30                 # sigmoid(fill) == 0 exactly (f32/bf16/fp16)


def _dice_partial_kernel(x_ref, t_ref, acc_ref):
    """Accumulate per-channel partial sums.

    x_ref, t_ref: (tile_k, 8, 128) tiles of one (channel, batch-element) stream.
    acc_ref:      (3, 8, 128) output block, VMEM-resident across the (N, K)
                  reduction for the current channel:
                    row 0: sum(u*t), row 1: sum(u), row 2: sum(t),
                  with u = tanh(x/2); the sigmoid affine 0.5*(u+1) is applied
                  in the JAX epilogue (2 fewer VPU ops per vreg here).
    """
    first = jnp.logical_and(pl.program_id(1) == 0, pl.program_id(2) == 0)

    @pl.when(first)
    def _():
        acc_ref[...] = jnp.zeros_like(acc_ref)

    tile_k = x_ref.shape[0]
    zero = jnp.zeros((_SUBLANE, _LANE), jnp.float32)

    # Stream one (8, 128) vreg at a time into a few vreg accumulators: no big
    # intermediates for Mosaic to spill, 2 loads + ~5 VPU ops + 1 EUP per vreg.
    def body(i, carry):
        ut_acc, u_acc, t_acc = carry
        x = x_ref[i].astype(jnp.float32)
        t = t_ref[i].astype(jnp.float32)
        u = jnp.tanh(0.5 * x)            # single EUP transcendental / element
        return (ut_acc + u * t, u_acc + u, t_acc + t)

    ut_acc, u_acc, t_acc = lax.fori_loop(
        0, tile_k, body, (zero, zero, zero), unroll=min(8, tile_k))

    acc_ref[0] += ut_acc
    acc_ref[1] += u_acc
    acc_ref[2] += t_acc


def _choose_tile_k(k, cap):
    """Pick the K-tile size (in 1024-element vreg groups).

    Prefer an exact divisor of k near the cap (no K padding needed); never
    collapse below cap // 4 — tiny tiles drop streaming efficiency below ~30%
    of the HBM roofline.  Returns (tile_k, padded_k).
    """
    cap = max(1, min(int(cap), int(k)))
    for d in range(cap, max(0, cap // 4), -1):
        if k % d == 0:
            return d, k                       # clean split, no padding
    return cap, -(-k // cap) * cap            # pad K up to a multiple of cap


def _pack(a, k_padded, fill):
    """(N, C, M) -> (N, C, k_padded, 8, 128).

    A pure (free) reshape when M == k_padded * 1024; otherwise one jnp.pad with
    a numerically neutral fill.
    """
    n, c, m = a.shape
    m_pad = k_padded * _PACK
    if m_pad != m:
        # TODO(synk): for M % 1024 != 0 this pad costs an extra HBM read+write
        # of both streams; an in-kernel ragged-tail mask would avoid it.
        a = jnp.pad(a, ((0, 0), (0, 0), (0, m_pad - m)), constant_values=fill)
    return a.reshape(n, c, k_padded, _SUBLANE, _LANE)


@functools.partial(
    jax.jit, static_argnames=("classification", "max_block_k", "stream_dtype"))
def dice_loss(inputs, targets, smooth=1.0, classification=False,
              max_block_k=512, stream_dtype=None):
    """Pallas TPU implementation of DiceLoss.forward (PyTorch reference).

    stream_dtype: optional dtype (e.g. jnp.bfloat16) the HBM streams are cast
      to before the kernel; accumulation is always f32.  bf16 streams halve
      HBM traffic (~2x end-to-end for this memory-bound kernel).
    max_block_k: tile size in 1024-element groups (~2 MiB f32 at 512).  Raise
      to 1024 on v5e/v6e (128 MiB VMEM); keep <= 512 on v7x (64 MiB per-TC).
    """
    if classification:
        total = inputs.size
        # Channel is the only "parallel" grid axis: split the flat stream into
        # pseudo-channels so both v7x TensorCores are engaged.  Sums are
        # permutation invariant, so the split is free (recombined in epilogue).
        cc = 1
        for cand in (8, 4, 2):
            if total % cand == 0:
                cc = cand
                break
        x3 = inputs.reshape(1, cc, total // cc)
        t3 = targets.reshape(1, cc, total // cc)
    else:
        n, c, h, w = inputs.shape
        assert c == 4, "reference module hard-codes reshape(4, -1)"
        x3 = inputs.reshape(n, c, h * w)
        t3 = targets.reshape(n, c, h * w)

    if stream_dtype is not None:
        x3 = x3.astype(stream_dtype)
        t3 = t3.astype(stream_dtype)

    N, C, M = x3.shape
    K0 = -(-M // _PACK)                           # number of (8,128) groups
    tile_k, Kp = _choose_tile_k(K0, max_block_k)

    # Neutral fills: x pad -> sigmoid == 0 exactly (tanh -> -1), t pad -> 0.
    xp = _pack(x3, Kp, fill=_NEG_FILL)
    tp = _pack(t3, Kp, fill=0)

    grid = (C, N, Kp // tile_k)

    total_elems = xp.size
    cost = pl.CostEstimate(
        flops=5 * total_elems,
        transcendentals=total_elems,
        bytes_accessed=total_elems * xp.dtype.itemsize
        + tp.size * tp.dtype.itemsize
        + C * 3 * _SUBLANE * _LANE * 4,
    )

    in_block = (None, None, tile_k, _SUBLANE, _LANE)
    partials = pl.pallas_call(
        _dice_partial_kernel,
        out_shape=jax.ShapeDtypeStruct((C, 3, _SUBLANE, _LANE), jnp.float32),
        grid_spec=pltpu.PrefetchScalarGridSpec(
            num_scalar_prefetch=0,
            grid=grid,
            in_specs=[
                pl.BlockSpec(in_block, lambda c, n, j: (n, c, j, 0, 0)),
                pl.BlockSpec(in_block, lambda c, n, j: (n, c, j, 0, 0)),
            ],
            out_specs=pl.BlockSpec(
                (None, 3, _SUBLANE, _LANE), lambda c, n, j: (c, 0, 0, 0)
            ),
        ),
        compiler_params=pltpu.CompilerParams(
            dimension_semantics=("parallel", "arbitrary", "arbitrary"),
            vmem_limit_bytes=32 * 1024 * 1024,
        ),
        cost_estimate=cost,
    )(xp, tp)

    # Tiny epilogue: cross-lane reduce + sigmoid affine fold + dice + mean.
    sums = jnp.sum(partials, axis=(2, 3))          # (C, 3): [Σ u*t, Σ u, Σ t]
    if classification:
        sums = jnp.sum(sums, axis=0, keepdims=True)
        count = N * C * Kp * _PACK                 # padded element count
    else:
        count = N * Kp * _PACK                     # padded per-channel count
    sum_ut, sum_u, sum_t = sums[:, 0], sums[:, 1], sums[:, 2]
    inter = 0.5 * (sum_ut + sum_t)                 # Σ sigmoid(x) * t
    s_sum = 0.5 * sum_u + 0.5 * count              # Σ sigmoid(x); pads cancel
    dice = (2.0 * inter + smooth) / (s_sum + sum_t + smooth)
    return 1.0 - jnp.mean(dice)


def _dice_loss_ref(inputs, targets, smooth=1.0, classification=False):
    # Pure-JAX reference mirroring the PyTorch module, for correctness checks.
    s = jax.nn.sigmoid(inputs.astype(jnp.float32))
    t = targets.astype(jnp.float32)
    if classification:
        s = s.reshape(1, -1)
        t = t.reshape(1, -1)
    else:
        s = jnp.transpose(s, (1, 0, 2, 3)).reshape(4, -1)
        t = jnp.transpose(t, (1, 0, 2, 3)).reshape(4, -1)
    inter = jnp.sum(s * t, axis=1)
    dice = (2.0 * inter + smooth) / (jnp.sum(s, axis=1) + jnp.sum(t, axis=1) + smooth)
    return 1.0 - jnp.mean(dice)


if __name__ == "__main__":
    key = jax.random.PRNGKey(0)
    k1, k2 = jax.random.split(key)

    # Small shapes consistent with the module: N=2, C=4 (required), H=W=16.
    x = jax.random.normal(k1, (2, 4, 16, 16), dtype=jnp.float32)
    t = jax.random.bernoulli(k2, 0.5, (2, 4, 16, 16)).astype(jnp.float32)

    # 1) Segmentation path (per-channel dice, mean over 4 channels).
    loss = jax.block_until_ready(dice_loss(x, t, smooth=1.0))
    ref = _dice_loss_ref(x, t, smooth=1.0)
    assert jnp.allclose(loss, ref, atol=1e-4, rtol=1e-4), (loss, ref)

    # 2) classification=True path (flatten everything; pseudo-channel split).
    loss_c = jax.block_until_ready(dice_loss(x, t, smooth=1.0, classification=True))
    ref_c = _dice_loss_ref(x, t, smooth=1.0, classification=True)
    assert jnp.allclose(loss_c, ref_c, atol=1e-4, rtol=1e-4), (loss_c, ref_c)

    # 3) bf16 streams (recommended for bandwidth); f32 accumulation in-kernel.
    loss_bf = jax.block_until_ready(
        dice_loss(x, t, smooth=1.0, stream_dtype=jnp.bfloat16))
    assert jnp.allclose(loss_bf, ref, atol=1e-2, rtol=1e-2), (loss_bf, ref)

    # 4) Multi-tile reduction + neutral K padding (K0=5 -> tile_k=4 -> Kp=8).
    k3, k4 = jax.random.split(jax.random.PRNGKey(1))
    x2 = jax.random.normal(k3, (2, 4, 64, 80), dtype=jnp.float32)
    t2 = jax.random.bernoulli(k4, 0.5, (2, 4, 64, 80)).astype(jnp.float32)
    loss2 = jax.block_until_ready(dice_loss(x2, t2, smooth=1.0, max_block_k=4))
    ref2 = _dice_loss_ref(x2, t2, smooth=1.0)
    assert jnp.allclose(loss2, ref2, atol=1e-4, rtol=1e-4), (loss2, ref2)

    print("KERNEL_OK")
</pallas_src>

<mosaic_0001>
module attributes {stable_mosaic.version = 11 : i64} {
  func.func @_dice_partial_kernel(%arg0: i32, %arg1: i32, %arg2: i32, %arg3: memref<1x1x1x8x128xf32, #tpu.memory_space<vmem>>, %arg4: memref<1x1x1x8x128xf32, #tpu.memory_space<vmem>>, %arg5: memref<1x3x8x128xf32, #tpu.memory_space<vmem>>) attributes {dimension_semantics = [#tpu.dimension_semantics<parallel>, #tpu.dimension_semantics<arbitrary>, #tpu.dimension_semantics<arbitrary>], iteration_bounds = array<i64: 4, 2, 1>, scalar_prefetch = 0 : i64, scratch_operands = 0 : i64, tpu.core_type = #tpu.core_type<tc>, window_params = [{transform_indices = @transform_0, window_bounds = array<i64: 1, 1, 1, 8, 128>}, {transform_indices = @transform_1, window_bounds = array<i64: 1, 1, 1, 8, 128>}, {transform_indices = @transform_2, window_bounds = array<i64: 1, 3, 8, 128>}]} {
    %c0_i32 = arith.constant 0 : i32
    %0 = arith.cmpi eq, %arg1, %c0_i32 : i32
    %c0_i32_0 = arith.constant 0 : i32
    %1 = arith.cmpi eq, %arg2, %c0_i32_0 : i32
    %2 = arith.andi %0, %1 : i1
    %3 = arith.extui %2 : i1 to i32
    %c0_i32_1 = arith.constant 0 : i32
    %4 = arith.cmpi ne, %3, %c0_i32_1 : i32
    scf.if %4 {
      %cst_33 = arith.constant 0.000000e+00 : f32
      %37 = vector.broadcast %cst_33 : f32 to vector<3x8x128xf32>
      %c0_34 = arith.constant 0 : index
      %c0_35 = arith.constant 0 : index
      %c0_36 = arith.constant 0 : index
      %c0_37 = arith.constant 0 : index
      %38 = vector.load %arg5[%c0_34, %c0_35, %c0_36, %c0_37] : memref<1x3x8x128xf32, #tpu.memory_space<vmem>>, vector<1x3x8x128xf32>
      %39 = vector.shape_cast %38 : vector<1x3x8x128xf32> to vector<3x8x128xf32>
      %40 = vector.shape_cast %37 : vector<3x8x128xf32> to vector<1x3x8x128xf32>
      tpu.vector_store %arg5[%c0_34, %c0_35, %c0_36, %c0_37], %40 {strides = array<i32>} : memref<1x3x8x128xf32, #tpu.memory_space<vmem>>, vector<1x3x8x128xf32>,
    } else {
    }
    %cst = arith.constant 0.000000e+00 : f32
    %5 = vector.broadcast %cst : f32 to vector<8x128xf32>
    %c0_i32_2 = arith.constant 0 : i32
    %c0 = arith.constant 0 : index
    %c0_3 = arith.constant 0 : index
    %6 = arith.index_cast %c0_i32_2 : i32 to index
    %c0_4 = arith.constant 0 : index
    %c0_5 = arith.constant 0 : index
    %7 = vector.load %arg3[%c0, %c0_3, %6, %c0_4, %c0_5] : memref<1x1x1x8x128xf32, #tpu.memory_space<vmem>>, vector<1x1x1x8x128xf32>
    %8 = vector.shape_cast %7 : vector<1x1x1x8x128xf32> to vector<8x128xf32>
    %c0_6 = arith.constant 0 : index
    %c0_7 = arith.constant 0 : index
    %9 = arith.index_cast %c0_i32_2 : i32 to index
    %c0_8 = arith.constant 0 : index
    %c0_9 = arith.constant 0 : index
    %10 = vector.load %arg4[%c0_6, %c0_7, %9, %c0_8, %c0_9] : memref<1x1x1x8x128xf32, #tpu.memory_space<vmem>>, vector<1x1x1x8x128xf32>
    %11 = vector.shape_cast %10 : vector<1x1x1x8x128xf32> to vector<8x128xf32>
    %cst_10 = arith.constant 5.000000e-01 : f32
    %12 = vector.broadcast %cst_10 : f32 to vector<8x128xf32>
    %13 = arith.mulf %12, %8 : vector<8x128xf32>
    %14 = math.tanh %13 : vector<8x128xf32>
    %15 = arith.mulf %14, %11 : vector<8x128xf32>
    %16 = arith.addf %5, %15 : vector<8x128xf32>
    %17 = arith.addf %5, %14 : vector<8x128xf32>
    %18 = arith.addf %5, %11 : vector<8x128xf32>
    %c1_i32 = arith.constant 1 : i32
    %c0_11 = arith.constant 0 : index
    %c0_12 = arith.constant 0 : index
    %c0_13 = arith.constant 0 : index
    %c0_14 = arith.constant 0 : index
    %19 = vector.load %arg5[%c0_11, %c0_12, %c0_13, %c0_14] : memref<1x3x8x128xf32, #tpu.memory_space<vmem>>, vector<1x1x8x128xf32>
    %20 = vector.shape_cast %19 : vector<1x1x8x128xf32> to vector<8x128xf32>
    %21 = arith.addf %20, %16 : vector<8x128xf32>
    %c0_15 = arith.constant 0 : index
    %c0_16 = arith.constant 0 : index
    %c0_17 = arith.constant 0 : index
    %c0_18 = arith.constant 0 : index
    %22 = vector.load %arg5[%c0_15, %c0_16, %c0_17, %c0_18] : memref<1x3x8x128xf32, #tpu.memory_space<vmem>>, vector<1x1x8x128xf32>
    %23 = vector.shape_cast %22 : vector<1x1x8x128xf32> to vector<8x128xf32>
    %24 = vector.shape_cast %21 : vector<8x128xf32> to vector<1x1x8x128xf32>
    tpu.vector_store %arg5[%c0_15, %c0_16, %c0_17, %c0_18], %24 {strides = array<i32>} : memref<1x3x8x128xf32, #tpu.memory_space<vmem>>, vector<1x1x8x128xf32>,
    %c0_19 = arith.constant 0 : index
    %c1 = arith.constant 1 : index
    %c0_20 = arith.constant 0 : index
    %c0_21 = arith.constant 0 : index
    %25 = vector.load %arg5[%c0_19, %c1, %c0_20, %c0_21] : memref<1x3x8x128xf32, #tpu.memory_space<vmem>>, vector<1x1x8x128xf32>
    %26 = vector.shape_cast %25 : vector<1x1x8x128xf32> to vector<8x128xf32>
    %27 = arith.addf %26, %17 : vector<8x128xf32>
    %c0_22 = arith.constant 0 : index
    %c1_23 = arith.constant 1 : index
    %c0_24 = arith.constant 0 : index
    %c0_25 = arith.constant 0 : index
    %28 = vector.load %arg5[%c0_22, %c1_23, %c0_24, %c0_25] : memref<1x3x8x128xf32, #tpu.memory_space<vmem>>, vector<1x1x8x128xf32>
    %29 = vector.shape_cast %28 : vector<1x1x8x128xf32> to vector<8x128xf32>
    %30 = vector.shape_cast %27 : vector<8x128xf32> to vector<1x1x8x128xf32>
    tpu.vector_store %arg5[%c0_22, %c1_23, %c0_24, %c0_25], %30 {strides = array<i32>} : memref<1x3x8x128xf32, #tpu.memory_space<vmem>>, vector<1x1x8x128xf32>,
    %c0_26 = arith.constant 0 : index
    %c2 = arith.constant 2 : index
    %c0_27 = arith.constant 0 : index
    %c0_28 = arith.constant 0 : index
    %31 = vector.load %arg5[%c0_26, %c2, %c0_27, %c0_28] : memref<1x3x8x128xf32, #tpu.memory_space<vmem>>, vector<1x1x8x128xf32>
    %32 = vector.shape_cast %31 : vector<1x1x8x128xf32> to vector<8x128xf32>
    %33 = arith.addf %32, %18 : vector<8x128xf32>
    %c0_29 = arith.constant 0 : index
    %c2_30 = arith.constant 2 : index
    %c0_31 = arith.constant 0 : index
    %c0_32 = arith.constant 0 : index
    %34 = vector.load %arg5[%c0_29, %c2_30, %c0_31, %c0_32] : memref<1x3x8x128xf32, #tpu.memory_space<vmem>>, vector<1x1x8x128xf32>
    %35 = vector.shape_cast %34 : vector<1x1x8x128xf32> to vector<8x128xf32>
    %36 = vector.shape_cast %33 : vector<8x128xf32> to vector<1x1x8x128xf32>
    tpu.vector_store %arg5[%c0_29, %c2_30, %c0_31, %c0_32], %36 {strides = array<i32>} : memref<1x3x8x128xf32, #tpu.memory_space<vmem>>, vector<1x1x8x128xf32>,
    return
  }
  func.func @transform_0(%arg0: i32, %arg1: i32, %arg2: i32) -> (i32, i32, i32, i32, i32) {
    %c0_i32 = arith.constant 0 : i32
    %c0_i32_0 = arith.constant 0 : i32
    %c0_i32_1 = arith.constant 0 : i32
    return %arg1, %arg0, %arg2, %c0_i32, %c0_i32_0 : i32, i32, i32, i32, i32
  }
  func.func @transform_1(%arg0: i32, %arg1: i32, %arg2: i32) -> (i32, i32, i32, i32, i32) {
    %c0_i32 = arith.constant 0 : i32
    %c0_i32_0 = arith.constant 0 : i32
    %c0_i32_1 = arith.constant 0 : i32
    return %arg1, %arg0, %arg2, %c0_i32, %c0_i32_0 : i32, i32, i32, i32, i32
  }
  func.func @transform_2(%arg0: i32, %arg1: i32, %arg2: i32) -> (i32, i32, i32, i32) {
    %c0_i32 = arith.constant 0 : i32
    %c0_i32_0 = arith.constant 0 : i32
    %c0_i32_1 = arith.constant 0 : i32
    %c0_i32_2 = arith.constant 0 : i32
    return %arg0, %c0_i32, %c0_i32_0, %c0_i32_1 : i32, i32, i32, i32
  }
}

</mosaic_0001>

<llo_original>
// kernel: dice_loss.1
$region0: #{dice_loss.1}
  #allocation0 [shape = 'u32[]', space=smem, size = 0x4, offset = 0x4, fixed_abs, tag = 'smem constant byte address 0x4 - core index']
  #allocation1 [shape = 'u32[144,128]{1,0:T(1,128)}', space=vmem, size = 0x12000, scoped, tag = 'internal scratch']
  %s0 = inlined_call_operand.vmem [shape: f32[2,4,1,8,128], index: 0, kind: input, shape index: {}]
  %s1 = inlined_call_operand.vmem [shape: f32[2,4,1,8,128], index: 1, kind: input, shape index: {}]
  %s2 = inlined_call_operand.vmem [shape: f32[4,3,8,128], index: 2, kind: output, shape index: {}]
  %s3 = sld [smem:[#allocation0]]
  $region45: #{dice_loss.1} parent=0
    _
  %s5 = ssub.s32 1, %s3
  %s6 = scalar_select 0, %s5, %s3
  loop: start=0, step=1, limit=10
  $region2: #{dice_loss.1} parent=0 // loop_pre_header
    _
  $region3: #{dice_loss.1} parent=0 // loop_header
    %s8 = sphi 0, %s12
    %p9 = scmp.ge.s32.totalorder %s8, 10
    %s15 = sphi 0, %s34
    %s16 = sphi 0, %s30
    %s17 = sphi 0, %s26
    %s18 = sphi 0, %s15
    %s19 = sphi 0, %s16
    %s20 = sphi 0, %s17
    %s21 = sphi 0, %s18
    %s22 = sphi 0, %s19
    %s23 = sphi 0, %s20
    %s41 = sphi 0, %s43
    %s44 = sphi 0, %s41
    %s45 = sphi 0, %s44
    %s61 = sphi 0, %s45
    %s71 = sphi 0, %s73
    %s74 = sphi 0, %s71
    %s75 = sphi 0, %s74
    %s91 = sphi 0, %s75
    %s97 = sphi 0, %s99
    %s100 = sphi 0, %s97
    %s101 = sphi 0, %s100
    %s117 = sphi 0, %s101
  $region4: #{dice_loss.1} parent=0 // loop_header_branch
    %11 = sbr.rel (%p9) target = $region8
  $region5: #{dice_loss.1} parent=0 // loop_body
    %s13 = ssub.s32 %s8, 1
    %s14 = ssub.s32 %s8, 2
    %s24 = sadd.s32 1, %s17
    %p25 = scmp.ge.s32.totalorder %s24, 1
    %s26 = scalar_select %p25, 0, %s24
    %s27 = sadd.s32 1, %s16
    %s28 = scalar_select %p25, %s27, %s16
    %p29 = scmp.ge.s32.totalorder %s28, 2
    %s30 = scalar_select %p29, 0, %s28
    %s31 = sadd.s32 1, %s15
    %s32 = scalar_select %p29, %s31, %s15
    %p33 = scmp.ge.s32.totalorder %s32, 4
    %s34 = scalar_select %p33, 0, %s32
    %s35 = ssub.s32 %s16, %s30
    %s36 = ssub.s32 %s15, %s34
    %s37 = sor.u32 %s35, %s36
    %s38 = ssub.s32 %s17, %s26
    %s39 = sor.u32 %s37, %s38
    %p40 = scmp.eq.s32.totalorder %s39, 0
    %s42 = sadd.s32 %s41, 1
    %s43 = scalar_select %p40, %s41, %s42
    %p46 = pneg %p40
    %p47 = scmp.eq.s32.totalorder %s8, 7
    %p48 = por %p46, %p47
    %p49 = scmp.ne.s32.totalorder %s41, %s44
    %p50 = scmp.eq.s32.totalorder %s8, 0
    %p51 = por %p49, %p50
    %p52 = scmp.ne.s32.totalorder %s41, %s44
    %p53 = scmp.eq.s32.totalorder %s13, 7
    %p54 = por %p52, %p53
    %p55 = scmp.ne.s32.totalorder %s44, %s45
    %p56 = scmp.eq.s32.totalorder %s13, 0
    %p57 = por %p55, %p56
    %p58 = scmp.ne.s32.totalorder %s44, %s45
    %p59 = scmp.eq.s32.totalorder %s14, 7
    %p60 = por %p58, %p59
    %p62 = scmp.ne.s32.totalorder %s45, %s61
    %p63 = scmp.eq.s32.totalorder %s14, 0
    %p64 = por %p62, %p63
    %s65 = ssub.s32 %s16, %s30
    %s66 = ssub.s32 %s15, %s34
    %s67 = sor.u32 %s65, %s66
    %s68 = ssub.s32 %s17, %s26
    %s69 = sor.u32 %s67, %s68
    %p70 = scmp.eq.s32.totalorder %s69, 0
    %s72 = sadd.s32 %s71, 1
    %s73 = scalar_select %p70, %s71, %s72
    %p76 = pneg %p70
    %p77 = scmp.eq.s32.totalorder %s8, 7
    %p78 = por %p76, %p77
    %p79 = scmp.ne.s32.totalorder %s71, %s74
    %p80 = scmp.eq.s32.totalorder %s8, 0
    %p81 = por %p79, %p80
    %p82 = scmp.ne.s32.totalorder %s71, %s74
    %p83 = scmp.eq.s32.totalorder %s13, 7
    %p84 = por %p82, %p83
    %p85 = scmp.ne.s32.totalorder %s74, %s75
    %p86 = scmp.eq.s32.totalorder %s13, 0
    %p87 = por %p85, %p86
    %p88 = scmp.ne.s32.totalorder %s74, %s75
    %p89 = scmp.eq.s32.totalorder %s14, 7
    %p90 = por %p88, %p89
    %p92 = scmp.ne.s32.totalorder %s75, %s91
    %p93 = scmp.eq.s32.totalorder %s14, 0
    %p94 = por %p92, %p93
    %s95 = ssub.s32 %s15, %s34
    %p96 = scmp.eq.s32.totalorder %s95, 0
    %s98 = sadd.s32 %s97, 1
    %s99 = scalar_select %p96, %s97, %s98
    %p102 = pneg %p96
    %p103 = scmp.eq.s32.totalorder %s8, 7
    %p104 = por %p102, %p103
    %p105 = scmp.ne.s32.totalorder %s97, %s100
    %p106 = scmp.eq.s32.totalorder %s8, 0
    %p107 = por %p105, %p106
    %p108 = scmp.ne.s32.totalorder %s97, %s100
    %p109 = scmp.eq.s32.totalorder %s13, 7
    %p110 = por %p108, %p109
    %p111 = scmp.ne.s32.totalorder %s100, %s101
    %p112 = scmp.eq.s32.totalorder %s13, 0
    %p113 = por %p111, %p112
    %p114 = scmp.ne.s32.totalorder %s100, %s101
    %p115 = scmp.eq.s32.totalorder %s14, 7
    %p116 = por %p114, %p115
    %p118 = scmp.ne.s32.totalorder %s101, %s117
    %p119 = scmp.eq.s32.totalorder %s14, 0
    %p120 = por %p118, %p119
    %p121 = scmp.le.s32.totalorder 1, %s8
    %p122 = scmp.lt.s32.totalorder %s8, 9
    %p123 = pnand %p121, %p122
    %p124 = pneg %p123
    // Predicated region
    $region9: #{dice_loss.1} parent=5 // pred_check
      _
    $region10: #{dice_loss.1} parent=5 // pred_check_branch
      %126 = sbr.rel (%p123) target = $region12
    $region11: #{dice_loss.1} parent=5 // pred_region
      %s127 = ssub.s32 %s8, 1
    $region12: #{dice_loss.1} parent=5 // pred_fallthru
      _
    %p128 = scmp.lt.s32.totalorder %s8, 8
    // Predicated region
    $region13: #{dice_loss.1} parent=5 // pred_check
      %p129 = pneg %p128
    $region14: #{dice_loss.1} parent=5 // pred_check_branch
      %131 = sbr.rel (%p129) target = $region16
    $region15: #{dice_loss.1} parent=5 // pred_region
      // Predicated region
      $region17: #{dice_loss.1} parent=15 // pred_check
        %p132 = pneg %p51
      $region18: #{dice_loss.1} parent=15 // pred_check_branch
        %134 = sbr.rel (%p132) target = $region20
      $region19: #{dice_loss.1} parent=15 // pred_region
        %p135 = scmp.lt.s32.totalorder %s16, 1
        %s136 = scalar_select %p135, %s16, 1
        %p137 = scmp.lt.s32.totalorder %s15, 3
        %s138 = scalar_select %p137, %s15, 3
        %p139 = scmp.lt.s32.totalorder %s17, 0
        %s140 = scalar_select %p139, %s17, 0
        %s141 = sadd.s32 %s140, %s138
        %s142 = smul.addr %s136, 4
        %s143 = sadd.s32 %s141, %s142
        %s144 = smul.addr %s143, 8
        %s145 = scalar_lea.vmem %s0, %s144
      $region20: #{dice_loss.1} parent=15 // pred_fallthru
        _
      // Predicated region
      $region21: #{dice_loss.1} parent=15 // pred_check
        %p146 = pneg %p81
      $region22: #{dice_loss.1} parent=15 // pred_check_branch
        %148 = sbr.rel (%p146) target = $region24
      $region23: #{dice_loss.1} parent=15 // pred_region
        %p149 = scmp.lt.s32.totalorder %s16, 1
        %s150 = scalar_select %p149, %s16, 1
        %p151 = scmp.lt.s32.totalorder %s15, 3
        %s152 = scalar_select %p151, %s15, 3
        %p153 = scmp.lt.s32.totalorder %s17, 0
        %s154 = scalar_select %p153, %s17, 0
        %s155 = sadd.s32 %s154, %s152
        %s156 = smul.addr %s150, 4
        %s157 = sadd.s32 %s155, %s156
        %s158 = smul.addr %s157, 8
        %s159 = scalar_lea.vmem %s1, %s158
      $region24: #{dice_loss.1} parent=15 // pred_fallthru
        _
    $region16: #{dice_loss.1} parent=5 // pred_fallthru
      _
    %p160 = scmp.le.s32.totalorder 1, %s8
    %p161 = scmp.lt.s32.totalorder %s8, 9
    %p162 = pnand %p160, %p161
    %p163 = pneg %p162
    // Predicated region
    $region25: #{dice_loss.1} parent=5 // pred_check
      _
    $region26: #{dice_loss.1} parent=5 // pred_check_branch
      %165 = sbr.rel (%p162) target = $region28
    $region27: #{dice_loss.1} parent=5 // pred_region
      %s166 = ssub.s32 %s8, 1
      %p167 = scmp.lt.s32.totalorder %s19, 1
      %s168 = scalar_select %p167, %s19, 1
      %p169 = scmp.lt.s32.totalorder %s18, 3
      %s170 = scalar_select %p169, %s18, 3
      %p171 = scmp.lt.s32.totalorder %s20, 0
      %s172 = scalar_select %p171, %s20, 0
      %s173 = sadd.s32 %s172, %s170
      %s174 = smul.addr %s168, 4
      %s175 = sadd.s32 %s173, %s174
      %s176 = smul.addr %s175, 8
      %s177 = scalar_lea.vmem %s0, %s176
      %p178 = pneg %p57
      %p179 = pneg %p54
      %p180 = scmp.lt.s32.totalorder %s19, 1
      %s181 = scalar_select %p180, %s19, 1
      %p182 = scmp.lt.s32.totalorder %s18, 3
      %s183 = scalar_select %p182, %s18, 3
      %p184 = scmp.lt.s32.totalorder %s20, 0
      %s185 = scalar_select %p184, %s20, 0
      %s186 = sadd.s32 %s185, %s183
      %s187 = smul.addr %s181, 4
      %s188 = sadd.s32 %s186, %s187
      %s189 = smul.addr %s188, 8
      %s190 = scalar_lea.vmem %s1, %s189
      %p191 = pneg %p87
      %p192 = pneg %p84
      %p193 = pneg %p113
      %p194 = pneg %p110
      %p195 = scmp.lt.s32.totalorder %s18, 3
      %s196 = scalar_select %p195, %s18, 3
      %s197 = smul.addr %s196, 3
      %s198 = smul.addr %s197, 8
      %s199 = scalar_lea.vmem %s2, %s198
      %p200 = scmp.lt.s32.totalorder %s19, 1
      %s201 = scalar_select %p200, %s19, 1
      %p202 = scmp.lt.s32.totalorder %s18, 3
      %s203 = scalar_select %p202, %s18, 3
      %p204 = scmp.lt.s32.totalorder %s20, 0
      %s205 = scalar_select %p204, %s20, 0
      %s206 = sadd.s32 %s205, %s203
      %s207 = smul.addr %s201, 4
      %s208 = sadd.s32 %s206, %s207
      %s209 = smul.addr %s208, 8
      %s210 = scalar_lea.vmem %s0, %s209
      %p211 = scmp.lt.s32.totalorder %s19, 1
      %s212 = scalar_select %p211, %s19, 1
      %p213 = scmp.lt.s32.totalorder %s18, 3
      %s214 = scalar_select %p213, %s18, 3
      %p215 = scmp.lt.s32.totalorder %s20, 0
      %s216 = scalar_select %p215, %s20, 0
      %s217 = sadd.s32 %s216, %s214
      %s218 = smul.addr %s212, 4
      %s219 = sadd.s32 %s217, %s218
      %s220 = smul.addr %s219, 8
      %s221 = scalar_lea.vmem %s1, %s220
      %p222 = scmp.lt.s32.totalorder %s18, 3
      %s223 = scalar_select %p222, %s18, 3
      %s224 = smul.addr %s223, 3
      %s225 = smul.addr %s224, 8
      %s226 = scalar_lea.vmem %s2, %s225
      %p227 = scmp.eq.s32.totalorder %s19, 0
      %p228 = scmp.eq.s32.totalorder %s20, 0
      %p229 = pnand %p227, %p228
      %p230 = pneg %p229
      // Predicated region
      $region29: #{dice_loss.1} parent=27 // pred_check
        _
      $region30: #{dice_loss.1} parent=27 // pred_check_branch
        %232 = sbr.rel (%p229) target = $region32
      $region31: #{dice_loss.1} parent=27 // pred_region
        %233 = vst [vmem:[%s226] sm:$0xff] 0.0
        %234 = vst [vmem:[%s226 + $0x8] sm:$0xff] 0.0
        %235 = vst [vmem:[%s226 + $0x10] sm:$0xff] 0.0
      $region32: #{dice_loss.1} parent=27 // pred_fallthru
        _
      %v236 = vld [vmem:[%s210] sm:$0xff]
      %v237 = vld [vmem:[%s221] sm:$0xff]
      %v238 = vmul.f32 %v236, 0.5
      %v239 = vtanh.pop %v238
      %v240 = vmul.f32 %v239, %v237
      %v241 = vadd.f32 %v240, 0.0
      %v242 = vadd.f32 %v239, 0.0
      %v243 = vadd.f32 %v237, 0.0
      %v244 = vld [vmem:[%s226] sm:$0xff]
      %v245 = vadd.f32 %v244, %v241
      %246 = vst [vmem:[%s226] sm:$0xff] %v245
      %s247 = scalar_lea.vmem %s226, 8
      %v248 = vld [vmem:[%s247] sm:$0xff]
      %v249 = vadd.f32 %v248, %v242
      %250 = vst [vmem:[%s247] sm:$0xff] %v249
      %s251 = scalar_lea.vmem %s226, 16
      %v252 = vld [vmem:[%s251] sm:$0xff]
      %v253 = vadd.f32 %v252, %v243
      %254 = vst [vmem:[%s251] sm:$0xff] %v253
      %p255 = scmp.lt.s32.totalorder %s18, 3
      %s256 = scalar_select %p255, %s18, 3
      %s257 = smul.addr %s256, 3
      %s258 = smul.addr %s257, 8
      %s259 = scalar_lea.vmem %s2, %s258
      // Predicated region
      $region33: #{dice_loss.1} parent=27 // pred_check
        %p260 = pneg %p110
      $region34: #{dice_loss.1} parent=27 // pred_check_branch
        %262 = sbr.rel (%p260) target = $region36
      $region35: #{dice_loss.1} parent=27 // pred_region
        _
      $region36: #{dice_loss.1} parent=27 // pred_fallthru
        _
    $region28: #{dice_loss.1} parent=5 // pred_fallthru
      _
    %p263 = scmp.le.s32.totalorder 2, %s8
    // Predicated region
    $region37: #{dice_loss.1} parent=5 // pred_check
      %p264 = pneg %p263
    $region38: #{dice_loss.1} parent=5 // pred_check_branch
      %266 = sbr.rel (%p264) target = $region40
    $region39: #{dice_loss.1} parent=5 // pred_region
      %s267 = ssub.s32 %s8, 2
      // Predicated region
      $region41: #{dice_loss.1} parent=39 // pred_check
        %p268 = pneg %p116
      $region42: #{dice_loss.1} parent=39 // pred_check_branch
        %270 = sbr.rel (%p268) target = $region44
      $region43: #{dice_loss.1} parent=39 // pred_region
        %p271 = scmp.lt.s32.totalorder %s21, 3
        %s272 = scalar_select %p271, %s21, 3
        %s273 = smul.addr %s272, 3
        %s274 = smul.addr %s273, 8
        %s275 = scalar_lea.vmem %s2, %s274
      $region44: #{dice_loss.1} parent=39 // pred_fallthru
        _
    $region40: #{dice_loss.1} parent=5 // pred_fallthru
      _
  $region6: #{dice_loss.1} parent=0 // loop_footer
    %s12 = sadd.s32 1, %s8
  $region7: #{dice_loss.1} parent=0 // loop_footer_branch
    %7 = sbr.rel target = $region3
  $region8: #{dice_loss.1} parent=0 // loop_exit
    _

</llo_original>
